<compile_context>
chip_gen: v7x
topology: tpu7x:2x2x1
jax: 0.10.0
libtpu: 0.0.40
codegen_flags: <defaults>
</compile_context>

<pallas_src>
import jax
import jax.numpy as jnp
import numpy as np
from jax.experimental import pallas as pl
from jax.experimental.pallas import tpu as pltpu


def fusion_kernel(f0_ref, f1_ref, f2_ref, f3_ref,
                  ws_ref, wx_ref, bias_ref, o_ref):
    a = f0_ref[...]
    b = f1_ref[...]
    c = f2_ref[...]
    d = f3_ref[...]

    # Reductions over the 4 stacked branches (mean folded into sum on host).
    s = a + b + c + d                                        # sum (mean = 0.25*s)
    mx = jnp.maximum(jnp.maximum(a, b), jnp.maximum(c, d))   # max

    # Pre-composed (ll o classifier) projection: two [D, OUT_PAD] matmuls + bias.
    o_ref[...] = (jnp.dot(s, ws_ref[...], preferred_element_type=jnp.float32)
                  + jnp.dot(mx, wx_ref[...], preferred_element_type=jnp.float32)
                  + bias_ref[...])


def _pick_row_tile(n):
    # Largest tile that divides N, preferring >= 2 grid steps (keeps both v7x
    # TensorCores busy). Working set is tiny (D=32), so bigger is always safe.
    for t in (1024, 512, 256, 128, 64, 32, 16, 8):
        if n % t == 0 and n // t >= 2:
            return t
    for t in (1024, 512, 256, 128, 64, 32, 16, 8):
        if n % t == 0:
            return t
    return n


def combine_fusion_forward(f_pmi, f_cos, f_euc, f_co,
                           w_ll, b_ll, w_lin, b_lin, *, row_tile=None):
    """f_* : [N, D] float32
       w_ll : [D, 3D]  (torch nn.Linear(3D, D).weight, shape [out=D, in=3D])
       b_ll : [D]
       w_lin: [out, D] (torch nn.Linear(D, out).weight)
       b_lin: [out]
    """
    N, D = f_pmi.shape
    out_dim = w_lin.shape[0]
    if row_tile is None:
        row_tile = _pick_row_tile(N)
    assert N % row_tile == 0, (N, row_tile)

    # ---- host-side weight preparation (inference-only precomposition) ----
    # torch Linear does x @ W.T + b ; split W_ll.T into mean/max/sum blocks.
    w_ll_t = w_ll.T.astype(jnp.float32)          # [3D, D]
    wm = w_ll_t[0 * D:1 * D, :]                  # acts on mean
    wx = w_ll_t[1 * D:2 * D, :]                  # acts on max
    ws = w_ll_t[2 * D:3 * D, :]                  # acts on sum
    ws_fused = 0.25 * wm + ws                    # mean folded into sum: [D, D]

    w_lin_t = w_lin.T.astype(jnp.float32)        # [D, out]
    # Compose ll with the classifier (dropout is identity at inference).
    w_s = ws_fused @ w_lin_t                     # [D, out]
    w_x = wx @ w_lin_t                           # [D, out]
    bias = b_ll @ w_lin_t + b_lin                # [out]

    # Lane-dense output: pad out_dim up to a multiple of 128 (min 128).
    out_pad = max(128, ((out_dim + 127) // 128) * 128)
    pad = out_pad - out_dim
    w_s = jnp.pad(w_s, ((0, 0), (0, pad)))
    w_x = jnp.pad(w_x, ((0, 0), (0, pad)))
    bias2 = jnp.pad(bias, ((0, pad),)).reshape(1, out_pad)

    grid = (N // row_tile,)
    feat_spec = pl.BlockSpec((row_tile, D), lambda i: (i, 0))
    full = lambda shape: pl.BlockSpec(shape, lambda i: (0, 0))

    cost = pl.CostEstimate(
        flops=2 * 2 * N * D * out_pad + 7 * N * D,
        transcendentals=0,
        bytes_accessed=4 * N * D * 4 + N * out_pad * 4
                       + 2 * D * out_pad * 4 + out_pad * 4,
    )

    out_padded = pl.pallas_call(
        fusion_kernel,
        out_shape=jax.ShapeDtypeStruct((N, out_pad), jnp.float32),
        grid_spec=pltpu.PrefetchScalarGridSpec(
            num_scalar_prefetch=0,
            grid=grid,
            in_specs=[feat_spec, feat_spec, feat_spec, feat_spec,
                      full((D, out_pad)), full((D, out_pad)),
                      full((1, out_pad))],
            out_specs=pl.BlockSpec((row_tile, out_pad), lambda i: (i, 0)),
        ),
        compiler_params=pltpu.CompilerParams(
            dimension_semantics=("parallel",)),
        cost_estimate=cost,
    )(f_pmi, f_cos, f_euc, f_co, w_s, w_x, bias2)

    return out_padded[:, :out_dim]


def gcn_branch(content, adj, w, b):
    # Stand-in for the external pmi/cos/euc/co sub-models (plain-JAX glue).
    return jax.nn.relu(adj @ (content @ w) + b)


if __name__ == "__main__":
    key = jax.random.PRNGKey(0)
    # docs, input feat, hidden (in_dim), classes (out_dim)
    N, F_IN, D, OUT = 512, 32, 32, 8

    keys = jax.random.split(key, 12)
    content = jax.random.normal(keys[0], (N, F_IN), dtype=jnp.float32)
    adj_raw = jax.random.uniform(keys[1], (N, N), dtype=jnp.float32)
    adj = adj_raw / jnp.sum(adj_raw, axis=1, keepdims=True)  # row-normalized

    # Branch (sub-model) parameters — deterministic synthetic init.
    branch_params = []
    for i in range(4):
        w = jax.random.normal(keys[2 + i], (F_IN, D), dtype=jnp.float32) * (2.0 / F_IN) ** 0.5
        b = jnp.zeros((D,), dtype=jnp.float32)
        branch_params.append((w, b))

    # self.ll = nn.Linear(in_dim*3, in_dim)   -> weight [D, 3D], bias [D]
    w_ll = jax.random.normal(keys[6], (D, 3 * D), dtype=jnp.float32) * (1.0 / (3 * D)) ** 0.5
    b_ll = jax.random.normal(keys[7], (D,), dtype=jnp.float32) * 0.01

    # self.linear = nn.Linear(in_dim, out_dim), kaiming_normal_ weight, zero bias
    w_lin = jax.random.normal(keys[8], (OUT, D), dtype=jnp.float32) * (2.0 / D) ** 0.5
    b_lin = jnp.zeros((OUT,), dtype=jnp.float32)

    # Sub-model features (glue, plain JAX).
    feats = [gcn_branch(content, adj, w, b) for (w, b) in branch_params]
    f_pmi, f_cos, f_euc, f_co = feats

    # Pallas kernel: fusion (mean/max/sum) + ll + final linear (pre-composed).
    logits = combine_fusion_forward(f_pmi, f_cos, f_euc, f_co,
                                    w_ll, b_ll, w_lin, b_lin)
    logits = jax.block_until_ready(logits)

    # Reference (pure JAX, mirrors the PyTorch semantics for fusion_style=5).
    stack = jnp.stack(feats, axis=0)                       # [4, N, D]
    cat = jnp.concatenate([stack.mean(0), stack.max(0), stack.sum(0)], axis=1)
    ref = (cat @ w_ll.T + b_ll) @ w_lin.T + b_lin

    np.testing.assert_allclose(np.asarray(logits), np.asarray(ref),
                               rtol=2e-4, atol=2e-4)
    print("KERNEL_OK")
</pallas_src>

<mosaic_0001>
module attributes {stable_mosaic.version = 11 : i64} {
  func.func @fusion_kernel(%arg0: i32, %arg1: memref<256x32xf32, #tpu.memory_space<vmem>>, %arg2: memref<256x32xf32, #tpu.memory_space<vmem>>, %arg3: memref<256x32xf32, #tpu.memory_space<vmem>>, %arg4: memref<256x32xf32, #tpu.memory_space<vmem>>, %arg5: memref<32x128xf32, #tpu.memory_space<vmem>>, %arg6: memref<32x128xf32, #tpu.memory_space<vmem>>, %arg7: memref<1x128xf32, #tpu.memory_space<vmem>>, %arg8: memref<256x128xf32, #tpu.memory_space<vmem>>) attributes {dimension_semantics = [#tpu.dimension_semantics<parallel>], iteration_bounds = array<i64: 2>, scalar_prefetch = 0 : i64, scratch_operands = 0 : i64, tpu.core_type = #tpu.core_type<tc>, window_params = [{transform_indices = @transform_0, window_bounds = array<i64: 256, 32>}, {transform_indices = @transform_1, window_bounds = array<i64: 256, 32>}, {transform_indices = @transform_2, window_bounds = array<i64: 256, 32>}, {transform_indices = @transform_3, window_bounds = array<i64: 256, 32>}, {pipeline_mode = #tpu.pipeline_mode<synchronous>, transform_indices = @transform_4, window_bounds = array<i64: 32, 128>}, {pipeline_mode = #tpu.pipeline_mode<synchronous>, transform_indices = @transform_5, window_bounds = array<i64: 32, 128>}, {pipeline_mode = #tpu.pipeline_mode<synchronous>, transform_indices = @transform_6, window_bounds = array<i64: 1, 128>}, {transform_indices = @transform_7, window_bounds = array<i64: 256, 128>}]} {
    %c0 = arith.constant 0 : index
    %c0_0 = arith.constant 0 : index
    %0 = vector.load %arg1[%c0, %c0_0] : memref<256x32xf32, #tpu.memory_space<vmem>>, vector<256x32xf32>
    %c0_1 = arith.constant 0 : index
    %c0_2 = arith.constant 0 : index
    %1 = vector.load %arg2[%c0_1, %c0_2] : memref<256x32xf32, #tpu.memory_space<vmem>>, vector<256x32xf32>
    %c0_3 = arith.constant 0 : index
    %c0_4 = arith.constant 0 : index
    %2 = vector.load %arg3[%c0_3, %c0_4] : memref<256x32xf32, #tpu.memory_space<vmem>>, vector<256x32xf32>
    %c0_5 = arith.constant 0 : index
    %c0_6 = arith.constant 0 : index
    %3 = vector.load %arg4[%c0_5, %c0_6] : memref<256x32xf32, #tpu.memory_space<vmem>>, vector<256x32xf32>
    %4 = arith.addf %0, %1 : vector<256x32xf32>
    %5 = arith.addf %4, %2 : vector<256x32xf32>
    %6 = arith.addf %5, %3 : vector<256x32xf32>
    %7 = arith.maximumf %0, %1 : vector<256x32xf32>
    %8 = arith.maximumf %2, %3 : vector<256x32xf32>
    %9 = arith.maximumf %7, %8 : vector<256x32xf32>
    %c0_7 = arith.constant 0 : index
    %c0_8 = arith.constant 0 : index
    %10 = vector.load %arg5[%c0_7, %c0_8] : memref<32x128xf32, #tpu.memory_space<vmem>>, vector<32x128xf32>
    %cst = arith.constant dense<0.000000e+00> : vector<256x128xf32>
    %11 = tpu.matmul %6, %10, %cst {dimension_numbers = #tpu.dot_dimension_numbers<[1], [0], [0], [1], [0, 0, 1, 1], [], []>} : vector<256x32xf32>, vector<32x128xf32>, vector<256x128xf32> -> vector<256x128xf32>
    %c0_9 = arith.constant 0 : index
    %c0_10 = arith.constant 0 : index
    %12 = vector.load %arg6[%c0_9, %c0_10] : memref<32x128xf32, #tpu.memory_space<vmem>>, vector<32x128xf32>
    %cst_11 = arith.constant dense<0.000000e+00> : vector<256x128xf32>
    %13 = tpu.matmul %9, %12, %cst_11 {dimension_numbers = #tpu.dot_dimension_numbers<[1], [0], [0], [1], [0, 0, 1, 1], [], []>} : vector<256x32xf32>, vector<32x128xf32>, vector<256x128xf32> -> vector<256x128xf32>
    %14 = arith.addf %11, %13 : vector<256x128xf32>
    %c0_12 = arith.constant 0 : index
    %c0_13 = arith.constant 0 : index
    %15 = vector.load %arg7[%c0_12, %c0_13] : memref<1x128xf32, #tpu.memory_space<vmem>>, vector<1x128xf32>
    %16 = vector.broadcast %15 : vector<1x128xf32> to vector<256x128xf32>
    %17 = arith.addf %14, %16 : vector<256x128xf32>
    %c0_14 = arith.constant 0 : index
    %c0_15 = arith.constant 0 : index
    %18 = vector.load %arg8[%c0_14, %c0_15] : memref<256x128xf32, #tpu.memory_space<vmem>>, vector<256x128xf32>
    tpu.vector_store %arg8[%c0_14, %c0_15], %17 {strides = array<i32>} : memref<256x128xf32, #tpu.memory_space<vmem>>, vector<256x128xf32>,
    return
  }
  func.func @transform_0(%arg0: i32) -> (i32, i32) {
    %c0_i32 = arith.constant 0 : i32
    %c0_i32_0 = arith.constant 0 : i32
    return %arg0, %c0_i32 : i32, i32
  }
  func.func @transform_1(%arg0: i32) -> (i32, i32) {
    %c0_i32 = arith.constant 0 : i32
    %c0_i32_0 = arith.constant 0 : i32
    return %arg0, %c0_i32 : i32, i32
  }
  func.func @transform_2(%arg0: i32) -> (i32, i32) {
    %c0_i32 = arith.constant 0 : i32
    %c0_i32_0 = arith.constant 0 : i32
    return %arg0, %c0_i32 : i32, i32
  }
  func.func @transform_3(%arg0: i32) -> (i32, i32) {
    %c0_i32 = arith.constant 0 : i32
    %c0_i32_0 = arith.constant 0 : i32
    return %arg0, %c0_i32 : i32, i32
  }
  func.func @transform_4(%arg0: i32) -> (i32, i32) {
    %c0_i32 = arith.constant 0 : i32
    %c0_i32_0 = arith.constant 0 : i32
    %c0_i32_1 = arith.constant 0 : i32
    return %c0_i32, %c0_i32_0 : i32, i32
  }
  func.func @transform_5(%arg0: i32) -> (i32, i32) {
    %c0_i32 = arith.constant 0 : i32
    %c0_i32_0 = arith.constant 0 : i32
    %c0_i32_1 = arith.constant 0 : i32
    return %c0_i32, %c0_i32_0 : i32, i32
  }
  func.func @transform_6(%arg0: i32) -> (i32, i32) {
    %c0_i32 = arith.constant 0 : i32
    %c0_i32_0 = arith.constant 0 : i32
    %c0_i32_1 = arith.constant 0 : i32
    return %c0_i32, %c0_i32_0 : i32, i32
  }
  func.func @transform_7(%arg0: i32) -> (i32, i32) {
    %c0_i32 = arith.constant 0 : i32
    %c0_i32_0 = arith.constant 0 : i32
    return %arg0, %c0_i32 : i32, i32
  }
}

</mosaic_0001>

<llo_original>
// kernel: tpu_custom_call.1
$region0: #{tpu_custom_call.1}
  #allocation0 [shape = 'u32[]', space=smem, size = 0x4, offset = 0x4, fixed_abs, tag = 'smem constant byte address 0x4 - core index']
  #allocation1 [shape = 'u32[144,128]{1,0:T(1,128)}', space=vmem, size = 0x12000, scoped, tag = 'internal scratch']
  %s0 = inlined_call_operand.vmem [shape: f32[512,32], index: 0, kind: input, shape index: {}]
  %s1 = inlined_call_operand.vmem [shape: f32[512,32], index: 1, kind: input, shape index: {}]
  %s2 = inlined_call_operand.vmem [shape: f32[512,32], index: 2, kind: input, shape index: {}]
  %s3 = inlined_call_operand.vmem [shape: f32[512,32], index: 3, kind: input, shape index: {}]
  %s4 = inlined_call_operand.vmem [shape: f32[32,128], index: 4, kind: input, shape index: {}]
  %s5 = inlined_call_operand.vmem [shape: f32[32,128], index: 5, kind: input, shape index: {}]
  %s6 = inlined_call_operand.vmem [shape: f32[1,128], index: 6, kind: input, shape index: {}]
  %s7 = inlined_call_operand.hbm [shape: f32[512,128], index: 7, kind: output, shape index: {}]
  %s8 = sld [smem:[#allocation0]]
  $region61: #{tpu_custom_call.1} parent=0
    _
  %s10 = ssub.s32 1, %s8
  %s11 = scalar_select 0, %s10, %s8
  $region1: #{tpu_custom_call.1} parent=0
    #allocation2 [shape = 'u8[262144]{0}', space=vmem, size = 0x40000, scoped, tag = 'output window, operand 0']
    #allocation3 [shape = 's32[2]{0}', space=sflag, size = 0x8, scoped, tag = 'scoped memory for tpu_custom_call.1']
    %12 = vsyncpa [#allocation3], 0
    %s13 = scalar_lea.sflag [#allocation3], 1
    %14 = vsyncpa %s13, 0
    loop: start=0, step=1, limit=4
    $region2: #{tpu_custom_call.1} parent=1 // loop_pre_header
      _
    $region3: #{tpu_custom_call.1} parent=1 // loop_header
      %s16 = sphi 0, %s20
      %p17 = scmp.ge.s32.totalorder %s16, 4
      %s26 = sphi 0, %s28
      %s29 = sphi 0, %s26
      %s30 = sphi 0, %s29
      %s46 = sphi 0, %s30
      %s52 = sphi 0, %s54
      %s55 = sphi 0, %s52
      %s56 = sphi 0, %s55
      %s72 = sphi 0, %s56
      %s78 = sphi 0, %s80
      %s81 = sphi 0, %s78
      %s82 = sphi 0, %s81
      %s98 = sphi 0, %s82
      %s104 = sphi 0, %s106
      %s107 = sphi 0, %s104
      %s108 = sphi 0, %s107
      %s124 = sphi 0, %s108
      %s128 = sphi 0, %s128
      %s130 = sphi 0, %s128
      %s131 = sphi 0, %s130
      %s145 = sphi 0, %s131
      %s149 = sphi 0, %s149
      %s151 = sphi 0, %s149
      %s152 = sphi 0, %s151
      %s166 = sphi 0, %s152
      %s170 = sphi 0, %s170
      %s172 = sphi 0, %s170
      %s173 = sphi 0, %s172
      %s187 = sphi 0, %s173
      %s193 = sphi 0, %s195
      %s196 = sphi 0, %s193
      %s197 = sphi 0, %s196
      %s213 = sphi 0, %s197
    $region4: #{tpu_custom_call.1} parent=1 // loop_header_branch
      %19 = sbr.rel (%p17) target = $region8
    $region5: #{tpu_custom_call.1} parent=1 // loop_body
      %s21 = ssub.s32 %s16, 1
      %s22 = ssub.s32 %s16, 2
      %s23 = sadd.s32 %s16, 1
      %s24 = ssub.s32 %s16, %s23
      %p25 = scmp.eq.s32.totalorder %s24, 0
      %s27 = sadd.s32 %s26, 1
      %s28 = scalar_select %p25, %s26, %s27
      %p31 = pneg %p25
      %p32 = scmp.eq.s32.totalorder %s16, 1
      %p33 = por %p31, %p32
      %p34 = scmp.ne.s32.totalorder %s26, %s29
      %p35 = scmp.eq.s32.totalorder %s16, 0
      %p36 = por %p34, %p35
      %p37 = scmp.ne.s32.totalorder %s26, %s29
      %p38 = scmp.eq.s32.totalorder %s21, 1
      %p39 = por %p37, %p38
      %p40 = scmp.ne.s32.totalorder %s29, %s30
      %p41 = scmp.eq.s32.totalorder %s21, 0
      %p42 = por %p40, %p41
      %p43 = scmp.ne.s32.totalorder %s29, %s30
      %p44 = scmp.eq.s32.totalorder %s22, 1
      %p45 = por %p43, %p44
      %p47 = scmp.ne.s32.totalorder %s30, %s46
      %p48 = scmp.eq.s32.totalorder %s22, 0
      %p49 = por %p47, %p48
      %s50 = ssub.s32 %s16, %s23
      %p51 = scmp.eq.s32.totalorder %s50, 0
      %s53 = sadd.s32 %s52, 1
      %s54 = scalar_select %p51, %s52, %s53
      %p57 = pneg %p51
      %p58 = scmp.eq.s32.totalorder %s16, 1
      %p59 = por %p57, %p58
      %p60 = scmp.ne.s32.totalorder %s52, %s55
      %p61 = scmp.eq.s32.totalorder %s16, 0
      %p62 = por %p60, %p61
      %p63 = scmp.ne.s32.totalorder %s52, %s55
      %p64 = scmp.eq.s32.totalorder %s21, 1
      %p65 = por %p63, %p64
      %p66 = scmp.ne.s32.totalorder %s55, %s56
      %p67 = scmp.eq.s32.totalorder %s21, 0
      %p68 = por %p66, %p67
      %p69 = scmp.ne.s32.totalorder %s55, %s56
      %p70 = scmp.eq.s32.totalorder %s22, 1
      %p71 = por %p69, %p70
      %p73 = scmp.ne.s32.totalorder %s56, %s72
      %p74 = scmp.eq.s32.totalorder %s22, 0
      %p75 = por %p73, %p74
      %s76 = ssub.s32 %s16, %s23
      %p77 = scmp.eq.s32.totalorder %s76, 0
      %s79 = sadd.s32 %s78, 1
      %s80 = scalar_select %p77, %s78, %s79
      %p83 = pneg %p77
      %p84 = scmp.eq.s32.totalorder %s16, 1
      %p85 = por %p83, %p84
      %p86 = scmp.ne.s32.totalorder %s78, %s81
      %p87 = scmp.eq.s32.totalorder %s16, 0
      %p88 = por %p86, %p87
      %p89 = scmp.ne.s32.totalorder %s78, %s81
      %p90 = scmp.eq.s32.totalorder %s21, 1
      %p91 = por %p89, %p90
      %p92 = scmp.ne.s32.totalorder %s81, %s82
      %p93 = scmp.eq.s32.totalorder %s21, 0
      %p94 = por %p92, %p93
      %p95 = scmp.ne.s32.totalorder %s81, %s82
      %p96 = scmp.eq.s32.totalorder %s22, 1
      %p97 = por %p95, %p96
      %p99 = scmp.ne.s32.totalorder %s82, %s98
      %p100 = scmp.eq.s32.totalorder %s22, 0
      %p101 = por %p99, %p100
      %s102 = ssub.s32 %s16, %s23
      %p103 = scmp.eq.s32.totalorder %s102, 0
      %s105 = sadd.s32 %s104, 1
      %s106 = scalar_select %p103, %s104, %s105
      %p109 = pneg %p103
      %p110 = scmp.eq.s32.totalorder %s16, 1
      %p111 = por %p109, %p110
      %p112 = scmp.ne.s32.totalorder %s104, %s107
      %p113 = scmp.eq.s32.totalorder %s16, 0
      %p114 = por %p112, %p113
      %p115 = scmp.ne.s32.totalorder %s104, %s107
      %p116 = scmp.eq.s32.totalorder %s21, 1
      %p117 = por %p115, %p116
      %p118 = scmp.ne.s32.totalorder %s107, %s108
      %p119 = scmp.eq.s32.totalorder %s21, 0
      %p120 = por %p118, %p119
      %p121 = scmp.ne.s32.totalorder %s107, %s108
      %p122 = scmp.eq.s32.totalorder %s22, 1
      %p123 = por %p121, %p122
      %p125 = scmp.ne.s32.totalorder %s108, %s124
      %p126 = scmp.eq.s32.totalorder %s22, 0
      %p127 = por %p125, %p126
      %s129 = sadd.s32 %s128, 1
      %p132 = scmp.eq.s32.totalorder %s16, 1
      %p133 = scmp.ne.s32.totalorder %s128, %s130
      %p134 = scmp.eq.s32.totalorder %s16, 0
      %p135 = por %p133, %p134
      %p136 = scmp.ne.s32.totalorder %s128, %s130
      %p137 = scmp.eq.s32.totalorder %s21, 1
      %p138 = por %p136, %p137
      %p139 = scmp.ne.s32.totalorder %s130, %s131
      %p140 = scmp.eq.s32.totalorder %s21, 0
      %p141 = por %p139, %p140
      %p142 = scmp.ne.s32.totalorder %s130, %s131
      %p143 = scmp.eq.s32.totalorder %s22, 1
      %p144 = por %p142, %p143
      %p146 = scmp.ne.s32.totalorder %s131, %s145
      %p147 = scmp.eq.s32.totalorder %s22, 0
      %p148 = por %p146, %p147
      %s150 = sadd.s32 %s149, 1
      %p153 = scmp.eq.s32.totalorder %s16, 1
      %p154 = scmp.ne.s32.totalorder %s149, %s151
      %p155 = scmp.eq.s32.totalorder %s16, 0
      %p156 = por %p154, %p155
      %p157 = scmp.ne.s32.totalorder %s149, %s151
      %p158 = scmp.eq.s32.totalorder %s21, 1
      %p159 = por %p157, %p158
      %p160 = scmp.ne.s32.totalorder %s151, %s152
      %p161 = scmp.eq.s32.totalorder %s21, 0
      %p162 = por %p160, %p161
      %p163 = scmp.ne.s32.totalorder %s151, %s152
      %p164 = scmp.eq.s32.totalorder %s22, 1
      %p165 = por %p163, %p164
      %p167 = scmp.ne.s32.totalorder %s152, %s166
      %p168 = scmp.eq.s32.totalorder %s22, 0
      %p169 = por %p167, %p168
      %s171 = sadd.s32 %s170, 1
      %p174 = scmp.eq.s32.totalorder %s16, 1
      %p175 = scmp.ne.s32.totalorder %s170, %s172
      %p176 = scmp.eq.s32.totalorder %s16, 0
      %p177 = por %p175, %p176
      %p178 = scmp.ne.s32.totalorder %s170, %s172
      %p179 = scmp.eq.s32.totalorder %s21, 1
      %p180 = por %p178, %p179
      %p181 = scmp.ne.s32.totalorder %s172, %s173
      %p182 = scmp.eq.s32.totalorder %s21, 0
      %p183 = por %p181, %p182
      %p184 = scmp.ne.s32.totalorder %s172, %s173
      %p185 = scmp.eq.s32.totalorder %s22, 1
      %p186 = por %p184, %p185
      %p188 = scmp.ne.s32.totalorder %s173, %s187
      %p189 = scmp.eq.s32.totalorder %s22, 0
      %p190 = por %p188, %p189
      %s191 = ssub.s32 %s16, %s23
      %p192 = scmp.eq.s32.totalorder %s191, 0
      %s194 = sadd.s32 %s193, 1
      %s195 = scalar_select %p192, %s193, %s194
      %p198 = pneg %p192
      %p199 = scmp.eq.s32.totalorder %s16, 1
      %p200 = por %p198, %p199
      %p201 = scmp.ne.s32.totalorder %s193, %s196
      %p202 = scmp.eq.s32.totalorder %s16, 0
      %p203 = por %p201, %p202
      %p204 = scmp.ne.s32.totalorder %s193, %s196
      %p205 = scmp.eq.s32.totalorder %s21, 1
      %p206 = por %p204, %p205
      %p207 = scmp.ne.s32.totalorder %s196, %s197
      %p208 = scmp.eq.s32.totalorder %s21, 0
      %p209 = por %p207, %p208
      %p210 = scmp.ne.s32.totalorder %s196, %s197
      %p211 = scmp.eq.s32.totalorder %s22, 1
      %p212 = por %p210, %p211
      %p214 = scmp.ne.s32.totalorder %s197, %s213
      %p215 = scmp.eq.s32.totalorder %s22, 0
      %p216 = por %p214, %p215
      %p217 = scmp.le.s32.totalorder 1, %s16
      %p218 = scmp.lt.s32.totalorder %s16, 3
      %p219 = pnand %p217, %p218
      %p220 = pneg %p219
      // Predicated region
      $region9: #{tpu_custom_call.1} parent=5 // pred_check
        _
      $region10: #{tpu_custom_call.1} parent=5 // pred_check_branch
        %222 = sbr.rel (%p219) target = $region12
      $region11: #{tpu_custom_call.1} parent=5 // pred_region
        %s223 = ssub.s32 %s16, 1
        // Predicated region
        $region13: #{tpu_custom_call.1} parent=11 // pred_check
          %p224 = pneg %p141
        $region14: #{tpu_custom_call.1} parent=11 // pred_check_branch
          %226 = sbr.rel (%p224) target = $region16
        $region15: #{tpu_custom_call.1} parent=11 // pred_region
          _
        $region16: #{tpu_custom_call.1} parent=11 // pred_fallthru
          _
        // Predicated region
        $region17: #{tpu_custom_call.1} parent=11 // pred_check
          %p227 = pneg %p162
        $region18: #{tpu_custom_call.1} parent=11 // pred_check_branch
          %229 = sbr.rel (%p227) target = $region20
        $region19: #{tpu_custom_call.1} parent=11 // pred_region
          _
        $region20: #{tpu_custom_call.1} parent=11 // pred_fallthru
          _
        // Predicated region
        $region21: #{tpu_custom_call.1} parent=11 // pred_check
          %p230 = pneg %p183
        $region22: #{tpu_custom_call.1} parent=11 // pred_check_branch
          %232 = sbr.rel (%p230) target = $region24
        $region23: #{tpu_custom_call.1} parent=11 // pred_region
          _
        $region24: #{tpu_custom_call.1} parent=11 // pred_fallthru
          _
      $region12: #{tpu_custom_call.1} parent=5 // pred_fallthru
        _
      %p233 = scmp.lt.s32.totalorder %s16, 2
      // Predicated region
      $region25: #{tpu_custom_call.1} parent=5 // pred_check
        %p234 = pneg %p233
      $region26: #{tpu_custom_call.1} parent=5 // pred_check_branch
        %236 = sbr.rel (%p234) target = $region28
      $region27: #{tpu_custom_call.1} parent=5 // pred_region
        // Predicated region
        $region29: #{tpu_custom_call.1} parent=27 // pred_check
          %p237 = pneg %p36
        $region30: #{tpu_custom_call.1} parent=27 // pred_check_branch
          %239 = sbr.rel (%p237) target = $region32
        $region31: #{tpu_custom_call.1} parent=27 // pred_region
          %s240 = smul.u32 32, %s16
          %p241 = scmp.lt.s32.totalorder %s240, 63
          %s242 = scalar_select %p241, %s240, 63
          %s243 = smul.addr %s242, 8
          %s244 = scalar_lea.vmem %s0, %s243
          %s245 = smul.u32 32, %s16
        $region32: #{tpu_custom_call.1} parent=27 // pred_fallthru
          _
        // Predicated region
        $region33: #{tpu_custom_call.1} parent=27 // pred_check
          %p246 = pneg %p62
        $region34: #{tpu_custom_call.1} parent=27 // pred_check_branch
          %248 = sbr.rel (%p246) target = $region36
        $region35: #{tpu_custom_call.1} parent=27 // pred_region
          %s249 = smul.u32 32, %s16
          %p250 = scmp.lt.s32.totalorder %s249, 63
          %s251 = scalar_select %p250, %s249, 63
          %s252 = smul.addr %s251, 8
          %s253 = scalar_lea.vmem %s1, %s252
          %s254 = smul.u32 32, %s16
        $region36: #{tpu_custom_call.1} parent=27 // pred_fallthru
          _
        // Predicated region
        $region37: #{tpu_custom_call.1} parent=27 // pred_check
          %p255 = pneg %p88
        $region38: #{tpu_custom_call.1} parent=27 // pred_check_branch
          %257 = sbr.rel (%p255) target = $region40
        $region39: #{tpu_custom_call.1} parent=27 // pred_region
          %s258 = smul.u32 32, %s16
          %p259 = scmp.lt.s32.totalorder %s258, 63
          %s260 = scalar_select %p259, %s258, 63
          %s261 = smul.addr %s260, 8
          %s262 = scalar_lea.vmem %s2, %s261
          %s263 = smul.u32 32, %s16
        $region40: #{tpu_custom_call.1} parent=27 // pred_fallthru
          _
        // Predicated region
        $region41: #{tpu_custom_call.1} parent=27 // pred_check
          %p264 = pneg %p114
        $region42: #{tpu_custom_call.1} parent=27 // pred_check_branch
          %266 = sbr.rel (%p264) target = $region44
        $region43: #{tpu_custom_call.1} parent=27 // pred_region
          %s267 = smul.u32 32, %s16
          %p268 = scmp.lt.s32.totalorder %s267, 63
          %s269 = scalar_select %p268, %s267, 63
          %s270 = smul.addr %s269, 8
          %s271 = scalar_lea.vmem %s3, %s270
          %s272 = smul.u32 32, %s16
        $region44: #{tpu_custom_call.1} parent=27 // pred_fallthru
          _
      $region28: #{tpu_custom_call.1} parent=5 // pred_fallthru
        _
      %p273 = scmp.le.s32.totalorder 1, %s16
      %p274 = scmp.lt.s32.totalorder %s16, 3
      %p275 = pnand %p273, %p274
      %p276 = pneg %p275
      // Predicated region
      $region45: #{tpu_custom_call.1} parent=5 // pred_check
        _
      $region46: #{tpu_custom_call.1} parent=5 // pred_check_branch
        %278 = sbr.rel (%p275) target = $region48
      $region47: #{tpu_custom_call.1} parent=5 // pred_region
        %s279 = ssub.s32 %s16, 1
        %s280 = smul.u32 32, %s21
        %p281 = scmp.lt.s32.totalorder %s280, 63
        %s282 = scalar_select %p281, %s280, 63
        %s283 = smul.addr %s282, 8
        %s284 = scalar_lea.vmem %s0, %s283
        %p285 = pneg %p42
        %p286 = pneg %p39
        %s287 = smul.u32 32, %s21
        %p288 = scmp.lt.s32.totalorder %s287, 63
        %s289 = scalar_select %p288, %s287, 63
        %s290 = smul.addr %s289, 8
        %s291 = scalar_lea.vmem %s1, %s290
        %p292 = pneg %p68
        %p293 = pneg %p65
        %s294 = smul.u32 32, %s21
        %p295 = scmp.lt.s32.totalorder %s294, 63
        %s296 = scalar_select %p295, %s294, 63
        %s297 = smul.addr %s296, 8
        %s298 = scalar_lea.vmem %s2, %s297
        %p299 = pneg %p94
        %p300 = pneg %p91
        %s301 = smul.u32 32, %s21
        %p302 = scmp.lt.s32.totalorder %s301, 63
        %s303 = scalar_select %p302, %s301, 63
        %s304 = smul.addr %s303, 8
        %s305 = scalar_lea.vmem %s3, %s304
        %p306 = pneg %p120
        %p307 = pneg %p117
        %p308 = pneg %p141
        %p309 = pneg %p138
        %p310 = pneg %p162
        %p311 = pneg %p159
        %p312 = pneg %p183
        %p313 = pneg %p180
        %p314 = pneg %p209
        %p315 = pneg %p206
        %s316 = sand.u32 %s196, 1
        %s317 = scalar_lea.sflag [#allocation3], %s316
        %s318 = sand.u32 %s196, 1
        %s319 = smul.addr %s318, 256
        %s320 = scalar_lea.vmem [#allocation2], %s319
        %s321 = smul.u32 32, %s21
        %p322 = scmp.lt.s32.totalorder %s321, 63
        %s323 = scalar_select %p322, %s321, 63
        %s324 = smul.addr %s323, 8
        %s325 = scalar_lea.vmem %s0, %s324
        %s326 = smul.u32 32, %s21
        %s327 = smul.u32 32, %s21
        %p328 = scmp.lt.s32.totalorder %s327, 63
        %s329 = scalar_select %p328, %s327, 63
        %s330 = smul.addr %s329, 8
        %s331 = scalar_lea.vmem %s1, %s330
        %s332 = smul.u32 32, %s21
        %s333 = smul.u32 32, %s21
        %p334 = scmp.lt.s32.totalorder %s333, 63
        %s335 = scalar_select %p334, %s333, 63
        %s336 = smul.addr %s335, 8
        %s337 = scalar_lea.vmem %s2, %s336
        %s338 = smul.u32 32, %s21
        %s339 = smul.u32 32, %s21
        %p340 = scmp.lt.s32.totalorder %s339, 63
        %s341 = scalar_select %p340, %s339, 63
        %s342 = smul.addr %s341, 8
        %s343 = scalar_lea.vmem %s3, %s342
        %s344 = smul.u32 32, %s21
        %s345 = smul.u32 32, %s21
        %v346 = vld [vmem:[%s325] sm:$0xff]
        %v347 = vld [vmem:[%s325 + $0x8] sm:$0xff]
        %v348 = vld [vmem:[%s325 + $0x10] sm:$0xff]
        %v349 = vld [vmem:[%s325 + $0x18] sm:$0xff]
        %v350 = vld [vmem:[%s325 + $0x20] sm:$0xff]
        %v351 = vld [vmem:[%s325 + $0x28] sm:$0xff]
        %v352 = vld [vmem:[%s325 + $0x30] sm:$0xff]
        %v353 = vld [vmem:[%s325 + $0x38] sm:$0xff]
        %v354 = vld [vmem:[%s325 + $0x40] sm:$0xff]
        %v355 = vld [vmem:[%s325 + $0x48] sm:$0xff]
        %v356 = vld [vmem:[%s325 + $0x50] sm:$0xff]
        %v357 = vld [vmem:[%s325 + $0x58] sm:$0xff]
        %v358 = vld [vmem:[%s325 + $0x60] sm:$0xff]
        %v359 = vld [vmem:[%s325 + $0x68] sm:$0xff]
        %v360 = vld [vmem:[%s325 + $0x70] sm:$0xff]
        %v361 = vld [vmem:[%s325 + $0x78] sm:$0xff]
        %v362 = vld [vmem:[%s325 + $0x80] sm:$0xff]
        %v363 = vld [vmem:[%s325 + $0x88] sm:$0xff]
        %v364 = vld [vmem:[%s325 + $0x90] sm:$0xff]
        %v365 = vld [vmem:[%s325 + $0x98] sm:$0xff]
        %v366 = vld [vmem:[%s325 + $0xa0] sm:$0xff]
        %v367 = vld [vmem:[%s325 + $0xa8] sm:$0xff]
        %v368 = vld [vmem:[%s325 + $0xb0] sm:$0xff]
        %v369 = vld [vmem:[%s325 + $0xb8] sm:$0xff]
        %v370 = vld [vmem:[%s325 + $0xc0] sm:$0xff]
        %v371 = vld [vmem:[%s325 + $0xc8] sm:$0xff]
        %v372 = vld [vmem:[%s325 + $0xd0] sm:$0xff]
        %v373 = vld [vmem:[%s325 + $0xd8] sm:$0xff]
        %v374 = vld [vmem:[%s325 + $0xe0] sm:$0xff]
        %v375 = vld [vmem:[%s325 + $0xe8] sm:$0xff]
        %v376 = vld [vmem:[%s325 + $0xf0] sm:$0xff]
        %v377 = vld [vmem:[%s325 + $0xf8] sm:$0xff]
        %v378 = vld [vmem:[%s331] sm:$0xff]
        %v379 = vld [vmem:[%s331 + $0x8] sm:$0xff]
        %v380 = vld [vmem:[%s331 + $0x10] sm:$0xff]
        %v381 = vld [vmem:[%s331 + $0x18] sm:$0xff]
        %v382 = vld [vmem:[%s331 + $0x20] sm:$0xff]
        %v383 = vld [vmem:[%s331 + $0x28] sm:$0xff]
        %v384 = vld [vmem:[%s331 + $0x30] sm:$0xff]
        %v385 = vld [vmem:[%s331 + $0x38] sm:$0xff]
        %v386 = vld [vmem:[%s331 + $0x40] sm:$0xff]
        %v387 = vld [vmem:[%s331 + $0x48] sm:$0xff]
        %v388 = vld [vmem:[%s331 + $0x50] sm:$0xff]
        %v389 = vld [vmem:[%s331 + $0x58] sm:$0xff]
        %v390 = vld [vmem:[%s331 + $0x60] sm:$0xff]
        %v391 = vld [vmem:[%s331 + $0x68] sm:$0xff]
        %v392 = vld [vmem:[%s331 + $0x70] sm:$0xff]
        %v393 = vld [vmem:[%s331 + $0x78] sm:$0xff]
        %v394 = vld [vmem:[%s331 + $0x80] sm:$0xff]
        %v395 = vld [vmem:[%s331 + $0x88] sm:$0xff]
        %v396 = vld [vmem:[%s331 + $0x90] sm:$0xff]
        %v397 = vld [vmem:[%s331 + $0x98] sm:$0xff]
        %v398 = vld [vmem:[%s331 + $0xa0] sm:$0xff]
        %v399 = vld [vmem:[%s331 + $0xa8] sm:$0xff]
        %v400 = vld [vmem:[%s331 + $0xb0] sm:$0xff]
        %v401 = vld [vmem:[%s331 + $0xb8] sm:$0xff]
        %v402 = vld [vmem:[%s331 + $0xc0] sm:$0xff]
        %v403 = vld [vmem:[%s331 + $0xc8] sm:$0xff]
        %v404 = vld [vmem:[%s331 + $0xd0] sm:$0xff]
        %v405 = vld [vmem:[%s331 + $0xd8] sm:$0xff]
        %v406 = vld [vmem:[%s331 + $0xe0] sm:$0xff]
        %v407 = vld [vmem:[%s331 + $0xe8] sm:$0xff]
        %v408 = vld [vmem:[%s331 + $0xf0] sm:$0xff]
        %v409 = vld [vmem:[%s331 + $0xf8] sm:$0xff]
        %v410 = vld [vmem:[%s337] sm:$0xff]
        %v411 = vld [vmem:[%s337 + $0x8] sm:$0xff]
        %v412 = vld [vmem:[%s337 + $0x10] sm:$0xff]
        %v413 = vld [vmem:[%s337 + $0x18] sm:$0xff]
        %v414 = vld [vmem:[%s337 + $0x20] sm:$0xff]
        %v415 = vld [vmem:[%s337 + $0x28] sm:$0xff]
        %v416 = vld [vmem:[%s337 + $0x30] sm:$0xff]
        %v417 = vld [vmem:[%s337 + $0x38] sm:$0xff]
        %v418 = vld [vmem:[%s337 + $0x40] sm:$0xff]
        %v419 = vld [vmem:[%s337 + $0x48] sm:$0xff]
        %v420 = vld [vmem:[%s337 + $0x50] sm:$0xff]
        %v421 = vld [vmem:[%s337 + $0x58] sm:$0xff]
        %v422 = vld [vmem:[%s337 + $0x60] sm:$0xff]
        %v423 = vld [vmem:[%s337 + $0x68] sm:$0xff]
        %v424 = vld [vmem:[%s337 + $0x70] sm:$0xff]
        %v425 = vld [vmem:[%s337 + $0x78] sm:$0xff]
        %v426 = vld [vmem:[%s337 + $0x80] sm:$0xff]
        %v427 = vld [vmem:[%s337 + $0x88] sm:$0xff]
        %v428 = vld [vmem:[%s337 + $0x90] sm:$0xff]
        %v429 = vld [vmem:[%s337 + $0x98] sm:$0xff]
        %v430 = vld [vmem:[%s337 + $0xa0] sm:$0xff]
        %v431 = vld [vmem:[%s337 + $0xa8] sm:$0xff]
        %v432 = vld [vmem:[%s337 + $0xb0] sm:$0xff]
        %v433 = vld [vmem:[%s337 + $0xb8] sm:$0xff]
        %v434 = vld [vmem:[%s337 + $0xc0] sm:$0xff]
        %v435 = vld [vmem:[%s337 + $0xc8] sm:$0xff]
        %v436 = vld [vmem:[%s337 + $0xd0] sm:$0xff]
        %v437 = vld [vmem:[%s337 + $0xd8] sm:$0xff]
        %v438 = vld [vmem:[%s337 + $0xe0] sm:$0xff]
        %v439 = vld [vmem:[%s337 + $0xe8] sm:$0xff]
        %v440 = vld [vmem:[%s337 + $0xf0] sm:$0xff]
        %v441 = vld [vmem:[%s337 + $0xf8] sm:$0xff]
        %v442 = vld [vmem:[%s343] sm:$0xff]
        %v443 = vld [vmem:[%s343 + $0x8] sm:$0xff]
        %v444 = vld [vmem:[%s343 + $0x10] sm:$0xff]
        %v445 = vld [vmem:[%s343 + $0x18] sm:$0xff]
        %v446 = vld [vmem:[%s343 + $0x20] sm:$0xff]
        %v447 = vld [vmem:[%s343 + $0x28] sm:$0xff]
        %v448 = vld [vmem:[%s343 + $0x30] sm:$0xff]
        %v449 = vld [vmem:[%s343 + $0x38] sm:$0xff]
        %v450 = vld [vmem:[%s343 + $0x40] sm:$0xff]
        %v451 = vld [vmem:[%s343 + $0x48] sm:$0xff]
        %v452 = vld [vmem:[%s343 + $0x50] sm:$0xff]
        %v453 = vld [vmem:[%s343 + $0x58] sm:$0xff]
        %v454 = vld [vmem:[%s343 + $0x60] sm:$0xff]
        %v455 = vld [vmem:[%s343 + $0x68] sm:$0xff]
        %v456 = vld [vmem:[%s343 + $0x70] sm:$0xff]
        %v457 = vld [vmem:[%s343 + $0x78] sm:$0xff]
        %v458 = vld [vmem:[%s343 + $0x80] sm:$0xff]
        %v459 = vld [vmem:[%s343 + $0x88] sm:$0xff]
        %v460 = vld [vmem:[%s343 + $0x90] sm:$0xff]
        %v461 = vld [vmem:[%s343 + $0x98] sm:$0xff]
        %v462 = vld [vmem:[%s343 + $0xa0] sm:$0xff]
        %v463 = vld [vmem:[%s343 + $0xa8] sm:$0xff]
        %v464 = vld [vmem:[%s343 + $0xb0] sm:$0xff]
        %v465 = vld [vmem:[%s343 + $0xb8] sm:$0xff]
        %v466 = vld [vmem:[%s343 + $0xc0] sm:$0xff]
        %v467 = vld [vmem:[%s343 + $0xc8] sm:$0xff]
        %v468 = vld [vmem:[%s343 + $0xd0] sm:$0xff]
        %v469 = vld [vmem:[%s343 + $0xd8] sm:$0xff]
        %v470 = vld [vmem:[%s343 + $0xe0] sm:$0xff]
        %v471 = vld [vmem:[%s343 + $0xe8] sm:$0xff]
        %v472 = vld [vmem:[%s343 + $0xf0] sm:$0xff]
        %v473 = vld [vmem:[%s343 + $0xf8] sm:$0xff]
        %v474 = vadd.f32 %v346, %v378
        %v475 = vadd.f32 %v347, %v379
        %v476 = vadd.f32 %v348, %v380
        %v477 = vadd.f32 %v349, %v381
        %v478 = vadd.f32 %v350, %v382
        %v479 = vadd.f32 %v351, %v383
        %v480 = vadd.f32 %v352, %v384
        %v481 = vadd.f32 %v353, %v385
        %v482 = vadd.f32 %v354, %v386
        %v483 = vadd.f32 %v355, %v387
        %v484 = vadd.f32 %v356, %v388
        %v485 = vadd.f32 %v357, %v389
        %v486 = vadd.f32 %v358, %v390
        %v487 = vadd.f32 %v359, %v391
        %v488 = vadd.f32 %v360, %v392
        %v489 = vadd.f32 %v361, %v393
        %v490 = vadd.f32 %v362, %v394
        %v491 = vadd.f32 %v363, %v395
        %v492 = vadd.f32 %v364, %v396
        %v493 = vadd.f32 %v365, %v397
        %v494 = vadd.f32 %v366, %v398
        %v495 = vadd.f32 %v367, %v399
        %v496 = vadd.f32 %v368, %v400
        %v497 = vadd.f32 %v369, %v401
        %v498 = vadd.f32 %v370, %v402
        %v499 = vadd.f32 %v371, %v403
        %v500 = vadd.f32 %v372, %v404
        %v501 = vadd.f32 %v373, %v405
        %v502 = vadd.f32 %v374, %v406
        %v503 = vadd.f32 %v375, %v407
        %v504 = vadd.f32 %v376, %v408
        %v505 = vadd.f32 %v377, %v409
        %v506 = vadd.f32 %v474, %v410
        %v507 = vadd.f32 %v475, %v411
        %v508 = vadd.f32 %v476, %v412
        %v509 = vadd.f32 %v477, %v413
        %v510 = vadd.f32 %v478, %v414
        %v511 = vadd.f32 %v479, %v415
        %v512 = vadd.f32 %v480, %v416
        %v513 = vadd.f32 %v481, %v417
        %v514 = vadd.f32 %v482, %v418
        %v515 = vadd.f32 %v483, %v419
        %v516 = vadd.f32 %v484, %v420
        %v517 = vadd.f32 %v485, %v421
        %v518 = vadd.f32 %v486, %v422
        %v519 = vadd.f32 %v487, %v423
        %v520 = vadd.f32 %v488, %v424
        %v521 = vadd.f32 %v489, %v425
        %v522 = vadd.f32 %v490, %v426
        %v523 = vadd.f32 %v491, %v427
        %v524 = vadd.f32 %v492, %v428
        %v525 = vadd.f32 %v493, %v429
        %v526 = vadd.f32 %v494, %v430
        %v527 = vadd.f32 %v495, %v431
        %v528 = vadd.f32 %v496, %v432
        %v529 = vadd.f32 %v497, %v433
        %v530 = vadd.f32 %v498, %v434
        %v531 = vadd.f32 %v499, %v435
        %v532 = vadd.f32 %v500, %v436
        %v533 = vadd.f32 %v501, %v437
        %v534 = vadd.f32 %v502, %v438
        %v535 = vadd.f32 %v503, %v439
        %v536 = vadd.f32 %v504, %v440
        %v537 = vadd.f32 %v505, %v441
        %v538 = vadd.f32 %v506, %v442
        %v539 = vadd.f32 %v507, %v443
        %v540 = vadd.f32 %v508, %v444
        %v541 = vadd.f32 %v509, %v445
        %v542 = vadd.f32 %v510, %v446
        %v543 = vadd.f32 %v511, %v447
        %v544 = vadd.f32 %v512, %v448
        %v545 = vadd.f32 %v513, %v449
        %v546 = vadd.f32 %v514, %v450
        %v547 = vadd.f32 %v515, %v451
        %v548 = vadd.f32 %v516, %v452
        %v549 = vadd.f32 %v517, %v453
        %v550 = vadd.f32 %v518, %v454
        %v551 = vadd.f32 %v519, %v455
        %v552 = vadd.f32 %v520, %v456
        %v553 = vadd.f32 %v521, %v457
        %v554 = vadd.f32 %v522, %v458
        %v555 = vadd.f32 %v523, %v459
        %v556 = vadd.f32 %v524, %v460
        %v557 = vadd.f32 %v525, %v461
        %v558 = vadd.f32 %v526, %v462
        %v559 = vadd.f32 %v527, %v463
        %v560 = vadd.f32 %v528, %v464
        %v561 = vadd.f32 %v529, %v465
        %v562 = vadd.f32 %v530, %v466
        %v563 = vadd.f32 %v531, %v467
        %v564 = vadd.f32 %v532, %v468
        %v565 = vadd.f32 %v533, %v469
        %v566 = vadd.f32 %v534, %v470
        %v567 = vadd.f32 %v535, %v471
        %v568 = vadd.f32 %v536, %v472
        %v569 = vadd.f32 %v537, %v473
        %v570 = vmax.f32 %v346, %v378
        %v571 = vmax.f32 %v347, %v379
        %v572 = vmax.f32 %v348, %v380
        %v573 = vmax.f32 %v349, %v381
        %v574 = vmax.f32 %v350, %v382
        %v575 = vmax.f32 %v351, %v383
        %v576 = vmax.f32 %v352, %v384
        %v577 = vmax.f32 %v353, %v385
        %v578 = vmax.f32 %v354, %v386
        %v579 = vmax.f32 %v355, %v387
        %v580 = vmax.f32 %v356, %v388
        %v581 = vmax.f32 %v357, %v389
        %v582 = vmax.f32 %v358, %v390
        %v583 = vmax.f32 %v359, %v391
        %v584 = vmax.f32 %v360, %v392
        %v585 = vmax.f32 %v361, %v393
        %v586 = vmax.f32 %v362, %v394
        %v587 = vmax.f32 %v363, %v395
        %v588 = vmax.f32 %v364, %v396
        %v589 = vmax.f32 %v365, %v397
        %v590 = vmax.f32 %v366, %v398
        %v591 = vmax.f32 %v367, %v399
        %v592 = vmax.f32 %v368, %v400
        %v593 = vmax.f32 %v369, %v401
        %v594 = vmax.f32 %v370, %v402
        %v595 = vmax.f32 %v371, %v403
        %v596 = vmax.f32 %v372, %v404
        %v597 = vmax.f32 %v373, %v405
        %v598 = vmax.f32 %v374, %v406
        %v599 = vmax.f32 %v375, %v407
        %v600 = vmax.f32 %v376, %v408
        %v601 = vmax.f32 %v377, %v409
        %v602 = vmax.f32 %v410, %v442
        %v603 = vmax.f32 %v411, %v443
        %v604 = vmax.f32 %v412, %v444
        %v605 = vmax.f32 %v413, %v445
        %v606 = vmax.f32 %v414, %v446
        %v607 = vmax.f32 %v415, %v447
        %v608 = vmax.f32 %v416, %v448
        %v609 = vmax.f32 %v417, %v449
        %v610 = vmax.f32 %v418, %v450
        %v611 = vmax.f32 %v419, %v451
        %v612 = vmax.f32 %v420, %v452
        %v613 = vmax.f32 %v421, %v453
        %v614 = vmax.f32 %v422, %v454
        %v615 = vmax.f32 %v423, %v455
        %v616 = vmax.f32 %v424, %v456
        %v617 = vmax.f32 %v425, %v457
        %v618 = vmax.f32 %v426, %v458
        %v619 = vmax.f32 %v427, %v459
        %v620 = vmax.f32 %v428, %v460
        %v621 = vmax.f32 %v429, %v461
        %v622 = vmax.f32 %v430, %v462
        %v623 = vmax.f32 %v431, %v463
        %v624 = vmax.f32 %v432, %v464
        %v625 = vmax.f32 %v433, %v465
        %v626 = vmax.f32 %v434, %v466
        %v627 = vmax.f32 %v435, %v467
        %v628 = vmax.f32 %v436, %v468
        %v629 = vmax.f32 %v437, %v469
        %v630 = vmax.f32 %v438, %v470
        %v631 = vmax.f32 %v439, %v471
        %v632 = vmax.f32 %v440, %v472
        %v633 = vmax.f32 %v441, %v473
        %v634 = vmax.f32 %v570, %v602
        %v635 = vmax.f32 %v571, %v603
        %v636 = vmax.f32 %v572, %v604
        %v637 = vmax.f32 %v573, %v605
        %v638 = vmax.f32 %v574, %v606
        %v639 = vmax.f32 %v575, %v607
        %v640 = vmax.f32 %v576, %v608
        %v641 = vmax.f32 %v577, %v609
        %v642 = vmax.f32 %v578, %v610
        %v643 = vmax.f32 %v579, %v611
        %v644 = vmax.f32 %v580, %v612
        %v645 = vmax.f32 %v581, %v613
        %v646 = vmax.f32 %v582, %v614
        %v647 = vmax.f32 %v583, %v615
        %v648 = vmax.f32 %v584, %v616
        %v649 = vmax.f32 %v585, %v617
        %v650 = vmax.f32 %v586, %v618
        %v651 = vmax.f32 %v587, %v619
        %v652 = vmax.f32 %v588, %v620
        %v653 = vmax.f32 %v589, %v621
        %v654 = vmax.f32 %v590, %v622
        %v655 = vmax.f32 %v591, %v623
        %v656 = vmax.f32 %v592, %v624
        %v657 = vmax.f32 %v593, %v625
        %v658 = vmax.f32 %v594, %v626
        %v659 = vmax.f32 %v595, %v627
        %v660 = vmax.f32 %v596, %v628
        %v661 = vmax.f32 %v597, %v629
        %v662 = vmax.f32 %v598, %v630
        %v663 = vmax.f32 %v599, %v631
        %v664 = vmax.f32 %v600, %v632
        %v665 = vmax.f32 %v601, %v633
        %v666 = vld [vmem:[%s4] sm:$0xff]
        %v667 = vld [vmem:[%s4 + $0x8] sm:$0xff]
        %v668 = vld [vmem:[%s4 + $0x10] sm:$0xff]
        %v669 = vld [vmem:[%s4 + $0x18] sm:$0xff]
        %v670 = vld [vmem:[%s5] sm:$0xff]
        %v671 = vld [vmem:[%s5 + $0x8] sm:$0xff]
        %v672 = vld [vmem:[%s5 + $0x10] sm:$0xff]
        %v673 = vld [vmem:[%s5 + $0x18] sm:$0xff]
        %vm674 = vcmask 261120
        %v676 = vsel %vm674, %v634, 0
        %v679 = vsel %vm674, %v635, 0
        %v682 = vsel %vm674, %v636, 0
        %v685 = vsel %vm674, %v637, 0
        %v688 = vsel %vm674, %v638, 0
        %v691 = vsel %vm674, %v639, 0
        %v694 = vsel %vm674, %v640, 0
        %v697 = vsel %vm674, %v641, 0
        %v700 = vsel %vm674, %v642, 0
        %v703 = vsel %vm674, %v643, 0
        %v706 = vsel %vm674, %v644, 0
        %v709 = vsel %vm674, %v645, 0
        %v712 = vsel %vm674, %v646, 0
        %v715 = vsel %vm674, %v647, 0
        %v718 = vsel %vm674, %v648, 0
        %v721 = vsel %vm674, %v649, 0
        %v724 = vsel %vm674, %v650, 0
        %v727 = vsel %vm674, %v651, 0
        %v730 = vsel %vm674, %v652, 0
        %v733 = vsel %vm674, %v653, 0
        %v736 = vsel %vm674, %v654, 0
        %v739 = vsel %vm674, %v655, 0
        %v742 = vsel %vm674, %v656, 0
        %v745 = vsel %vm674, %v657, 0
        %v748 = vsel %vm674, %v658, 0
        %v751 = vsel %vm674, %v659, 0
        %v754 = vsel %vm674, %v660, 0
        %v757 = vsel %vm674, %v661, 0
        %v760 = vsel %vm674, %v662, 0
        %v763 = vsel %vm674, %v663, 0
        %v766 = vsel %vm674, %v664, 0
        %v769 = vsel %vm674, %v665, 0
        %771 = vmatprep.subr.mxu0 0.0
        %772 = vmatpush1.msra.mxu0 %v670
        %773 = vmatprep.subr.mxu0 0.0
        %774 = vmatpush1.msra.mxu0 %v671
        %775 = vmatprep.subr.mxu0 0.0
        %776 = vmatpush1.msra.mxu0 %v672
        %777 = vmatprep.subr.mxu0 0.0
        %778 = vmatpush1.msra.mxu0 %v673
        %779 = vmatprep.subr.mxu0 0.0
        %780 = vmatpush1.msra.mxu0 0.0
        %781 = vmatprep.subr.mxu0 0.0
        %782 = vmatpush1.msra.mxu0 0.0
        %783 = vmatprep.subr.mxu0 0.0
        %784 = vmatpush1.msra.mxu0 0.0
        %785 = vmatprep.subr.mxu0 0.0
        %786 = vmatpush1.msra.mxu0 0.0
        %787 = vmatprep.subr.mxu0 0.0
        %788 = vmatpush1.msra.mxu0 0.0
        %789 = vmatprep.subr.mxu0 0.0
        %790 = vmatpush1.msra.mxu0 0.0
        %791 = vmatprep.subr.mxu0 0.0
        %792 = vmatpush1.msra.mxu0 0.0
        %793 = vmatprep.subr.mxu0 0.0
        %794 = vmatpush1.msra.mxu0 0.0
        %795 = vmatprep.subr.mxu0 0.0
        %796 = vmatpush1.msra.mxu0 0.0
        %797 = vmatprep.subr.mxu0 0.0
        %798 = vmatpush1.msra.mxu0 0.0
        %799 = vmatprep.subr.mxu0 0.0
        %800 = vmatpush1.msra.mxu0 0.0
        %801 = vmatprep.subr.mxu0 0.0
        %802 = vmatpush1.msra.mxu0 0.0
        %803 = vmatprep.subr.mxu0 0.0
        %804 = vmatpush1.msra.mxu0 0.0
        %805 = vmatprep.subr.mxu0 0.0
        %806 = vmatpush1.msra.mxu0 0.0
        %807 = vmatprep.subr.mxu0 0.0
        %808 = vmatpush1.msra.mxu0 0.0
        %809 = vmatprep.subr.mxu0 0.0
        %810 = vmatpush1.msra.mxu0 0.0
        %811 = vmatprep.subr.mxu0 0.0
        %812 = vmatpush1.msra.mxu0 0.0
        %813 = vmatprep.subr.mxu0 0.0
        %814 = vmatpush1.msra.mxu0 0.0
        %815 = vmatprep.subr.mxu0 0.0
        %816 = vmatpush1.msra.mxu0 0.0
        %817 = vmatprep.subr.mxu0 0.0
        %818 = vmatpush1.msra.mxu0 0.0
        %819 = vmatprep.subr.mxu0 0.0
        %820 = vmatpush1.msra.mxu0 0.0
        %821 = vmatprep.subr.mxu0 0.0
        %822 = vmatpush1.msra.mxu0 0.0
        %823 = vmatprep.subr.mxu0 0.0
        %824 = vmatpush1.msra.mxu0 0.0
        %825 = vmatprep.subr.mxu0 0.0
        %826 = vmatpush1.msra.mxu0 0.0
        %827 = vmatprep.subr.mxu0 0.0
        %828 = vmatpush1.msra.mxu0 0.0
        %829 = vmatprep.subr.mxu0 0.0
        %830 = vmatpush1.msra.mxu0 0.0
        %831 = vmatprep.subr.mxu0 0.0
        %832 = vmatpush1.msra.mxu0 0.0
        %833 = vmatprep.subr.mxu0 0.0
        %834 = vmatpush1.msra.mxu0 0.0
        %835 = vmatprep.mubr.f32.mxu0 0.0
        %836 = vmatmul.mubr.f32.gmra.mrb[0].mxu0 %v676
        %v837 = vpop.f32.mrb[0].mxu0
        %v838 = vadd.f32 0.0, %v837
        %v839 = vpop.f32.mrb[0].mxu0
        %840 = vmatprep.mubr.f32.mxu0 0.0
        %841 = vmatmul.mubr.f32.gmra.mrb[0].mxu0 %v679
        %v842 = vpop.f32.mrb[0].mxu0
        %v843 = vadd.f32 0.0, %v842
        %v844 = vpop.f32.mrb[0].mxu0
        %845 = vmatprep.mubr.f32.mxu0 0.0
        %846 = vmatmul.mubr.f32.gmra.mrb[0].mxu0 %v682
        %v847 = vpop.f32.mrb[0].mxu0
        %v848 = vadd.f32 0.0, %v847
        %v849 = vpop.f32.mrb[0].mxu0
        %850 = vmatprep.mubr.f32.mxu0 0.0
        %851 = vmatmul.mubr.f32.gmra.mrb[0].mxu0 %v685
        %v852 = vpop.f32.mrb[0].mxu0
        %v853 = vadd.f32 0.0, %v852
        %v854 = vpop.f32.mrb[0].mxu0
        %855 = vmatprep.mubr.f32.mxu0 0.0
        %856 = vmatmul.mubr.f32.gmra.mrb[0].mxu0 %v688
        %v857 = vpop.f32.mrb[0].mxu0
        %v858 = vadd.f32 0.0, %v857
        %v859 = vpop.f32.mrb[0].mxu0
        %860 = vmatprep.mubr.f32.mxu0 0.0
        %861 = vmatmul.mubr.f32.gmra.mrb[0].mxu0 %v691
        %v862 = vpop.f32.mrb[0].mxu0
        %v863 = vadd.f32 0.0, %v862
        %v864 = vpop.f32.mrb[0].mxu0
        %865 = vmatprep.mubr.f32.mxu0 0.0
        %866 = vmatmul.mubr.f32.gmra.mrb[0].mxu0 %v694
        %v867 = vpop.f32.mrb[0].mxu0
        %v868 = vadd.f32 0.0, %v867
        %v869 = vpop.f32.mrb[0].mxu0
        %870 = vmatprep.mubr.f32.mxu0 0.0
        %871 = vmatmul.mubr.f32.gmra.mrb[0].mxu0 %v697
        %v872 = vpop.f32.mrb[0].mxu0
        %v873 = vadd.f32 0.0, %v872
        %v874 = vpop.f32.mrb[0].mxu0
        %875 = vmatprep.mubr.f32.mxu0 0.0
        %876 = vmatmul.mubr.f32.gmra.mrb[0].mxu0 %v700
        %v877 = vpop.f32.mrb[0].mxu0
        %v878 = vadd.f32 0.0, %v877
        %v879 = vpop.f32.mrb[0].mxu0
        %880 = vmatprep.mubr.f32.mxu0 0.0
        %881 = vmatmul.mubr.f32.gmra.mrb[0].mxu0 %v703
        %v882 = vpop.f32.mrb[0].mxu0
        %v883 = vadd.f32 0.0, %v882
        %v884 = vpop.f32.mrb[0].mxu0
        %885 = vmatprep.mubr.f32.mxu0 0.0
        %886 = vmatmul.mubr.f32.gmra.mrb[0].mxu0 %v706
        %v887 = vpop.f32.mrb[0].mxu0
        %v888 = vadd.f32 0.0, %v887
        %v889 = vpop.f32.mrb[0].mxu0
        %890 = vmatprep.mubr.f32.mxu0 0.0
        %891 = vmatmul.mubr.f32.gmra.mrb[0].mxu0 %v709
        %v892 = vpop.f32.mrb[0].mxu0
        %v893 = vadd.f32 0.0, %v892
        %v894 = vpop.f32.mrb[0].mxu0
        %895 = vmatprep.mubr.f32.mxu0 0.0
        %896 = vmatmul.mubr.f32.gmra.mrb[0].mxu0 %v712
        %v897 = vpop.f32.mrb[0].mxu0
        %v898 = vadd.f32 0.0, %v897
        %v899 = vpop.f32.mrb[0].mxu0
        %900 = vmatprep.mubr.f32.mxu0 0.0
        %901 = vmatmul.mubr.f32.gmra.mrb[0].mxu0 %v715
        %v902 = vpop.f32.mrb[0].mxu0
        %v903 = vadd.f32 0.0, %v902
        %v904 = vpop.f32.mrb[0].mxu0
        %905 = vmatprep.mubr.f32.mxu0 0.0
        %906 = vmatmul.mubr.f32.gmra.mrb[0].mxu0 %v718
        %v907 = vpop.f32.mrb[0].mxu0
        %v908 = vadd.f32 0.0, %v907
        %v909 = vpop.f32.mrb[0].mxu0
        %910 = vmatprep.mubr.f32.mxu0 0.0
        %911 = vmatmul.mubr.f32.gmra.mrb[0].mxu0 %v721
        %v912 = vpop.f32.mrb[0].mxu0
        %v913 = vadd.f32 0.0, %v912
        %v914 = vpop.f32.mrb[0].mxu0
        %915 = vmatprep.mubr.f32.mxu0 0.0
        %916 = vmatmul.mubr.f32.gmra.mrb[0].mxu0 %v724
        %v917 = vpop.f32.mrb[0].mxu0
        %v918 = vadd.f32 0.0, %v917
        %v919 = vpop.f32.mrb[0].mxu0
        %920 = vmatprep.mubr.f32.mxu0 0.0
        %921 = vmatmul.mubr.f32.gmra.mrb[0].mxu0 %v727
        %v922 = vpop.f32.mrb[0].mxu0
        %v923 = vadd.f32 0.0, %v922
        %v924 = vpop.f32.mrb[0].mxu0
        %925 = vmatprep.mubr.f32.mxu0 0.0
        %926 = vmatmul.mubr.f32.gmra.mrb[0].mxu0 %v730
        %v927 = vpop.f32.mrb[0].mxu0
        %v928 = vadd.f32 0.0, %v927
        %v929 = vpop.f32.mrb[0].mxu0
        %930 = vmatprep.mubr.f32.mxu0 0.0
        %931 = vmatmul.mubr.f32.gmra.mrb[0].mxu0 %v733
        %v932 = vpop.f32.mrb[0].mxu0
        %v933 = vadd.f32 0.0, %v932
        %v934 = vpop.f32.mrb[0].mxu0
        %935 = vmatprep.mubr.f32.mxu0 0.0
        %936 = vmatmul.mubr.f32.gmra.mrb[0].mxu0 %v736
        %v937 = vpop.f32.mrb[0].mxu0
        %v938 = vadd.f32 0.0, %v937
        %v939 = vpop.f32.mrb[0].mxu0
        %940 = vmatprep.mubr.f32.mxu0 0.0
        %941 = vmatmul.mubr.f32.gmra.mrb[0].mxu0 %v739
        %v942 = vpop.f32.mrb[0].mxu0
        %v943 = vadd.f32 0.0, %v942
        %v944 = vpop.f32.mrb[0].mxu0
        %945 = vmatprep.mubr.f32.mxu0 0.0
        %946 = vmatmul.mubr.f32.gmra.mrb[0].mxu0 %v742
        %v947 = vpop.f32.mrb[0].mxu0
        %v948 = vadd.f32 0.0, %v947
        %v949 = vpop.f32.mrb[0].mxu0
        %950 = vmatprep.mubr.f32.mxu0 0.0
        %951 = vmatmul.mubr.f32.gmra.mrb[0].mxu0 %v745
        %v952 = vpop.f32.mrb[0].mxu0
        %v953 = vadd.f32 0.0, %v952
        %v954 = vpop.f32.mrb[0].mxu0
        %955 = vmatprep.mubr.f32.mxu0 0.0
        %956 = vmatmul.mubr.f32.gmra.mrb[0].mxu0 %v748
        %v957 = vpop.f32.mrb[0].mxu0
        %v958 = vadd.f32 0.0, %v957
        %v959 = vpop.f32.mrb[0].mxu0
        %960 = vmatprep.mubr.f32.mxu0 0.0
        %961 = vmatmul.mubr.f32.gmra.mrb[0].mxu0 %v751
        %v962 = vpop.f32.mrb[0].mxu0
        %v963 = vadd.f32 0.0, %v962
        %v964 = vpop.f32.mrb[0].mxu0
        %965 = vmatprep.mubr.f32.mxu0 0.0
        %966 = vmatmul.mubr.f32.gmra.mrb[0].mxu0 %v754
        %v967 = vpop.f32.mrb[0].mxu0
        %v968 = vadd.f32 0.0, %v967
        %v969 = vpop.f32.mrb[0].mxu0
        %970 = vmatprep.mubr.f32.mxu0 0.0
        %971 = vmatmul.mubr.f32.gmra.mrb[0].mxu0 %v757
        %v972 = vpop.f32.mrb[0].mxu0
        %v973 = vadd.f32 0.0, %v972
        %v974 = vpop.f32.mrb[0].mxu0
        %975 = vmatprep.mubr.f32.mxu0 0.0
        %976 = vmatmul.mubr.f32.gmra.mrb[0].mxu0 %v760
        %v977 = vpop.f32.mrb[0].mxu0
        %v978 = vadd.f32 0.0, %v977
        %v979 = vpop.f32.mrb[0].mxu0
        %980 = vmatprep.mubr.f32.mxu0 0.0
        %981 = vmatmul.mubr.f32.gmra.mrb[0].mxu0 %v763
        %v982 = vpop.f32.mrb[0].mxu0
        %v983 = vadd.f32 0.0, %v982
        %v984 = vpop.f32.mrb[0].mxu0
        %985 = vmatprep.mubr.f32.mxu0 0.0
        %986 = vmatmul.mubr.f32.gmra.mrb[0].mxu0 %v766
        %v987 = vpop.f32.mrb[0].mxu0
        %v988 = vadd.f32 0.0, %v987
        %v989 = vpop.f32.mrb[0].mxu0
        %990 = vmatprep.mubr.f32.mxu0 0.0
        %991 = vmatmul.mubr.f32.gmra.mrb[0].mxu0 %v769
        %v992 = vpop.f32.mrb[0].mxu0
        %v993 = vadd.f32 0.0, %v992
        %v994 = vpop.f32.mrb[0].mxu0
        %995 = vdwg.mxu0
        %v997 = vsel %vm674, %v538, 0
        %v1000 = vsel %vm674, %v539, 0
        %v1003 = vsel %vm674, %v540, 0
        %v1006 = vsel %vm674, %v541, 0
        %v1009 = vsel %vm674, %v542, 0
        %v1012 = vsel %vm674, %v543, 0
        %v1015 = vsel %vm674, %v544, 0
        %v1018 = vsel %vm674, %v545, 0
        %v1021 = vsel %vm674, %v546, 0
        %v1024 = vsel %vm674, %v547, 0
        %v1027 = vsel %vm674, %v548, 0
        %v1030 = vsel %vm674, %v549, 0
        %v1033 = vsel %vm674, %v550, 0
        %v1036 = vsel %vm674, %v551, 0
        %v1039 = vsel %vm674, %v552, 0
        %v1042 = vsel %vm674, %v553, 0
        %v1045 = vsel %vm674, %v554, 0
        %v1048 = vsel %vm674, %v555, 0
        %v1051 = vsel %vm674, %v556, 0
        %v1054 = vsel %vm674, %v557, 0
        %v1057 = vsel %vm674, %v558, 0
        %v1060 = vsel %vm674, %v559, 0
        %v1063 = vsel %vm674, %v560, 0
        %v1066 = vsel %vm674, %v561, 0
        %v1069 = vsel %vm674, %v562, 0
        %v1072 = vsel %vm674, %v563, 0
        %v1075 = vsel %vm674, %v564, 0
        %v1078 = vsel %vm674, %v565, 0
        %v1081 = vsel %vm674, %v566, 0
        %v1084 = vsel %vm674, %v567, 0
        %v1087 = vsel %vm674, %v568, 0
        %v1090 = vsel %vm674, %v569, 0
        %1092 = vmatprep.subr.mxu0 0.0
        %1093 = vmatpush1.msra.mxu0 %v666
        %1094 = vmatprep.subr.mxu0 0.0
        %1095 = vmatpush1.msra.mxu0 %v667
        %1096 = vmatprep.subr.mxu0 0.0
        %1097 = vmatpush1.msra.mxu0 %v668
        %1098 = vmatprep.subr.mxu0 0.0
        %1099 = vmatpush1.msra.mxu0 %v669
        %1100 = vmatprep.subr.mxu0 0.0
        %1101 = vmatpush1.msra.mxu0 0.0
        %1102 = vmatprep.subr.mxu0 0.0
        %1103 = vmatpush1.msra.mxu0 0.0
        %1104 = vmatprep.subr.mxu0 0.0
        %1105 = vmatpush1.msra.mxu0 0.0
        %1106 = vmatprep.subr.mxu0 0.0
        %1107 = vmatpush1.msra.mxu0 0.0
        %1108 = vmatprep.subr.mxu0 0.0
        %1109 = vmatpush1.msra.mxu0 0.0
        %1110 = vmatprep.subr.mxu0 0.0
        %1111 = vmatpush1.msra.mxu0 0.0
        %1112 = vmatprep.subr.mxu0 0.0
        %1113 = vmatpush1.msra.mxu0 0.0
        %1114 = vmatprep.subr.mxu0 0.0
        %1115 = vmatpush1.msra.mxu0 0.0
        %1116 = vmatprep.subr.mxu0 0.0
        %1117 = vmatpush1.msra.mxu0 0.0
        %1118 = vmatprep.subr.mxu0 0.0
        %1119 = vmatpush1.msra.mxu0 0.0
        %1120 = vmatprep.subr.mxu0 0.0
        %1121 = vmatpush1.msra.mxu0 0.0
        %1122 = vmatprep.subr.mxu0 0.0
        %1123 = vmatpush1.msra.mxu0 0.0
        %1124 = vmatprep.subr.mxu0 0.0
        %1125 = vmatpush1.msra.mxu0 0.0
        %1126 = vmatprep.subr.mxu0 0.0
        %1127 = vmatpush1.msra.mxu0 0.0
        %1128 = vmatprep.subr.mxu0 0.0
        %1129 = vmatpush1.msra.mxu0 0.0
        %1130 = vmatprep.subr.mxu0 0.0
        %1131 = vmatpush1.msra.mxu0 0.0
        %1132 = vmatprep.subr.mxu0 0.0
        %1133 = vmatpush1.msra.mxu0 0.0
        %1134 = vmatprep.subr.mxu0 0.0
        %1135 = vmatpush1.msra.mxu0 0.0
        %1136 = vmatprep.subr.mxu0 0.0
        %1137 = vmatpush1.msra.mxu0 0.0
        %1138 = vmatprep.subr.mxu0 0.0
        %1139 = vmatpush1.msra.mxu0 0.0
        %1140 = vmatprep.subr.mxu0 0.0
        %1141 = vmatpush1.msra.mxu0 0.0
        %1142 = vmatprep.subr.mxu0 0.0
        %1143 = vmatpush1.msra.mxu0 0.0
        %1144 = vmatprep.subr.mxu0 0.0
        %1145 = vmatpush1.msra.mxu0 0.0
        %1146 = vmatprep.subr.mxu0 0.0
        %1147 = vmatpush1.msra.mxu0 0.0
        %1148 = vmatprep.subr.mxu0 0.0
        %1149 = vmatpush1.msra.mxu0 0.0
        %1150 = vmatprep.subr.mxu0 0.0
        %1151 = vmatpush1.msra.mxu0 0.0
        %1152 = vmatprep.subr.mxu0 0.0
        %1153 = vmatpush1.msra.mxu0 0.0
        %1154 = vmatprep.subr.mxu0 0.0
        %1155 = vmatpush1.msra.mxu0 0.0
        %1156 = vmatprep.mubr.f32.mxu0 0.0
        %1157 = vmatmul.mubr.f32.gmra.mrb[0].mxu0 %v997
        %v1158 = vpop.f32.mrb[0].mxu0
        %v1159 = vadd.f32 %v838, %v1158
        %v1160 = vpop.f32.mrb[0].mxu0
        %1161 = vmatprep.mubr.f32.mxu0 0.0
        %1162 = vmatmul.mubr.f32.gmra.mrb[0].mxu0 %v1000
        %v1163 = vpop.f32.mrb[0].mxu0
        %v1164 = vadd.f32 %v843, %v1163
        %v1165 = vpop.f32.mrb[0].mxu0
        %1166 = vmatprep.mubr.f32.mxu0 0.0
        %1167 = vmatmul.mubr.f32.gmra.mrb[0].mxu0 %v1003
        %v1168 = vpop.f32.mrb[0].mxu0
        %v1169 = vadd.f32 %v848, %v1168
        %v1170 = vpop.f32.mrb[0].mxu0
        %1171 = vmatprep.mubr.f32.mxu0 0.0
        %1172 = vmatmul.mubr.f32.gmra.mrb[0].mxu0 %v1006
        %v1173 = vpop.f32.mrb[0].mxu0
        %v1174 = vadd.f32 %v853, %v1173
        %v1175 = vpop.f32.mrb[0].mxu0
        %1176 = vmatprep.mubr.f32.mxu0 0.0
        %1177 = vmatmul.mubr.f32.gmra.mrb[0].mxu0 %v1009
        %v1178 = vpop.f32.mrb[0].mxu0
        %v1179 = vadd.f32 %v858, %v1178
        %v1180 = vpop.f32.mrb[0].mxu0
        %1181 = vmatprep.mubr.f32.mxu0 0.0
        %1182 = vmatmul.mubr.f32.gmra.mrb[0].mxu0 %v1012
        %v1183 = vpop.f32.mrb[0].mxu0
        %v1184 = vadd.f32 %v863, %v1183
        %v1185 = vpop.f32.mrb[0].mxu0
        %1186 = vmatprep.mubr.f32.mxu0 0.0
        %1187 = vmatmul.mubr.f32.gmra.mrb[0].mxu0 %v1015
        %v1188 = vpop.f32.mrb[0].mxu0
        %v1189 = vadd.f32 %v868, %v1188
        %v1190 = vpop.f32.mrb[0].mxu0
        %1191 = vmatprep.mubr.f32.mxu0 0.0
        %1192 = vmatmul.mubr.f32.gmra.mrb[0].mxu0 %v1018
        %v1193 = vpop.f32.mrb[0].mxu0
        %v1194 = vadd.f32 %v873, %v1193
        %v1195 = vpop.f32.mrb[0].mxu0
        %1196 = vmatprep.mubr.f32.mxu0 0.0
        %1197 = vmatmul.mubr.f32.gmra.mrb[0].mxu0 %v1021
        %v1198 = vpop.f32.mrb[0].mxu0
        %v1199 = vadd.f32 %v878, %v1198
        %v1200 = vpop.f32.mrb[0].mxu0
        %1201 = vmatprep.mubr.f32.mxu0 0.0
        %1202 = vmatmul.mubr.f32.gmra.mrb[0].mxu0 %v1024
        %v1203 = vpop.f32.mrb[0].mxu0
        %v1204 = vadd.f32 %v883, %v1203
        %v1205 = vpop.f32.mrb[0].mxu0
        %1206 = vmatprep.mubr.f32.mxu0 0.0
        %1207 = vmatmul.mubr.f32.gmra.mrb[0].mxu0 %v1027
        %v1208 = vpop.f32.mrb[0].mxu0
        %v1209 = vadd.f32 %v888, %v1208
        %v1210 = vpop.f32.mrb[0].mxu0
        %1211 = vmatprep.mubr.f32.mxu0 0.0
        %1212 = vmatmul.mubr.f32.gmra.mrb[0].mxu0 %v1030
        %v1213 = vpop.f32.mrb[0].mxu0
        %v1214 = vadd.f32 %v893, %v1213
        %v1215 = vpop.f32.mrb[0].mxu0
        %1216 = vmatprep.mubr.f32.mxu0 0.0
        %1217 = vmatmul.mubr.f32.gmra.mrb[0].mxu0 %v1033
        %v1218 = vpop.f32.mrb[0].mxu0
        %v1219 = vadd.f32 %v898, %v1218
        %v1220 = vpop.f32.mrb[0].mxu0
        %1221 = vmatprep.mubr.f32.mxu0 0.0
        %1222 = vmatmul.mubr.f32.gmra.mrb[0].mxu0 %v1036
        %v1223 = vpop.f32.mrb[0].mxu0
        %v1224 = vadd.f32 %v903, %v1223
        %v1225 = vpop.f32.mrb[0].mxu0
        %1226 = vmatprep.mubr.f32.mxu0 0.0
        %1227 = vmatmul.mubr.f32.gmra.mrb[0].mxu0 %v1039
        %v1228 = vpop.f32.mrb[0].mxu0
        %v1229 = vadd.f32 %v908, %v1228
        %v1230 = vpop.f32.mrb[0].mxu0
        %1231 = vmatprep.mubr.f32.mxu0 0.0
        %1232 = vmatmul.mubr.f32.gmra.mrb[0].mxu0 %v1042
        %v1233 = vpop.f32.mrb[0].mxu0
        %v1234 = vadd.f32 %v913, %v1233
        %v1235 = vpop.f32.mrb[0].mxu0
        %1236 = vmatprep.mubr.f32.mxu0 0.0
        %1237 = vmatmul.mubr.f32.gmra.mrb[0].mxu0 %v1045
        %v1238 = vpop.f32.mrb[0].mxu0
        %v1239 = vadd.f32 %v918, %v1238
        %v1240 = vpop.f32.mrb[0].mxu0
        %1241 = vmatprep.mubr.f32.mxu0 0.0
        %1242 = vmatmul.mubr.f32.gmra.mrb[0].mxu0 %v1048
        %v1243 = vpop.f32.mrb[0].mxu0
        %v1244 = vadd.f32 %v923, %v1243
        %v1245 = vpop.f32.mrb[0].mxu0
        %1246 = vmatprep.mubr.f32.mxu0 0.0
        %1247 = vmatmul.mubr.f32.gmra.mrb[0].mxu0 %v1051
        %v1248 = vpop.f32.mrb[0].mxu0
        %v1249 = vadd.f32 %v928, %v1248
        %v1250 = vpop.f32.mrb[0].mxu0
        %1251 = vmatprep.mubr.f32.mxu0 0.0
        %1252 = vmatmul.mubr.f32.gmra.mrb[0].mxu0 %v1054
        %v1253 = vpop.f32.mrb[0].mxu0
        %v1254 = vadd.f32 %v933, %v1253
        %v1255 = vpop.f32.mrb[0].mxu0
        %1256 = vmatprep.mubr.f32.mxu0 0.0
        %1257 = vmatmul.mubr.f32.gmra.mrb[0].mxu0 %v1057
        %v1258 = vpop.f32.mrb[0].mxu0
        %v1259 = vadd.f32 %v938, %v1258
        %v1260 = vpop.f32.mrb[0].mxu0
        %1261 = vmatprep.mubr.f32.mxu0 0.0
        %1262 = vmatmul.mubr.f32.gmra.mrb[0].mxu0 %v1060
        %v1263 = vpop.f32.mrb[0].mxu0
        %v1264 = vadd.f32 %v943, %v1263
        %v1265 = vpop.f32.mrb[0].mxu0
        %1266 = vmatprep.mubr.f32.mxu0 0.0
        %1267 = vmatmul.mubr.f32.gmra.mrb[0].mxu0 %v1063
        %v1268 = vpop.f32.mrb[0].mxu0
        %v1269 = vadd.f32 %v948, %v1268
        %v1270 = vpop.f32.mrb[0].mxu0
        %1271 = vmatprep.mubr.f32.mxu0 0.0
        %1272 = vmatmul.mubr.f32.gmra.mrb[0].mxu0 %v1066
        %v1273 = vpop.f32.mrb[0].mxu0
        %v1274 = vadd.f32 %v953, %v1273
        %v1275 = vpop.f32.mrb[0].mxu0
        %1276 = vmatprep.mubr.f32.mxu0 0.0
        %1277 = vmatmul.mubr.f32.gmra.mrb[0].mxu0 %v1069
        %v1278 = vpop.f32.mrb[0].mxu0
        %v1279 = vadd.f32 %v958, %v1278
        %v1280 = vpop.f32.mrb[0].mxu0
        %1281 = vmatprep.mubr.f32.mxu0 0.0
        %1282 = vmatmul.mubr.f32.gmra.mrb[0].mxu0 %v1072
        %v1283 = vpop.f32.mrb[0].mxu0
        %v1284 = vadd.f32 %v963, %v1283
        %v1285 = vpop.f32.mrb[0].mxu0
        %1286 = vmatprep.mubr.f32.mxu0 0.0
        %1287 = vmatmul.mubr.f32.gmra.mrb[0].mxu0 %v1075
        %v1288 = vpop.f32.mrb[0].mxu0
        %v1289 = vadd.f32 %v968, %v1288
        %v1290 = vpop.f32.mrb[0].mxu0
        %1291 = vmatprep.mubr.f32.mxu0 0.0
        %1292 = vmatmul.mubr.f32.gmra.mrb[0].mxu0 %v1078
        %v1293 = vpop.f32.mrb[0].mxu0
        %v1294 = vadd.f32 %v973, %v1293
        %v1295 = vpop.f32.mrb[0].mxu0
        %1296 = vmatprep.mubr.f32.mxu0 0.0
        %1297 = vmatmul.mubr.f32.gmra.mrb[0].mxu0 %v1081
        %v1298 = vpop.f32.mrb[0].mxu0
        %v1299 = vadd.f32 %v978, %v1298
        %v1300 = vpop.f32.mrb[0].mxu0
        %1301 = vmatprep.mubr.f32.mxu0 0.0
        %1302 = vmatmul.mubr.f32.gmra.mrb[0].mxu0 %v1084
        %v1303 = vpop.f32.mrb[0].mxu0
        %v1304 = vadd.f32 %v983, %v1303
        %v1305 = vpop.f32.mrb[0].mxu0
        %1306 = vmatprep.mubr.f32.mxu0 0.0
        %1307 = vmatmul.mubr.f32.gmra.mrb[0].mxu0 %v1087
        %v1308 = vpop.f32.mrb[0].mxu0
        %v1309 = vadd.f32 %v988, %v1308
        %v1310 = vpop.f32.mrb[0].mxu0
        %1311 = vmatprep.mubr.f32.mxu0 0.0
        %1312 = vmatmul.mubr.f32.gmra.mrb[0].mxu0 %v1090
        %v1313 = vpop.f32.mrb[0].mxu0
        %v1314 = vadd.f32 %v993, %v1313
        %v1315 = vpop.f32.mrb[0].mxu0
        %1316 = vdwg.mxu0
        %v1317 = vld [vmem:[%s6] sm:$0x1]
        %v1319 = vlaneseq
        %v1320 = vshrl.u32 %v1319, 7
        %v1321 = vsub.s32 0, %v1320
        %v1322 = vrot.slane %v1317, %v1321
        %v1324 = vadd.f32 %v1159, %v1322
        %v1325 = vadd.f32 %v1164, %v1322
        %v1326 = vadd.f32 %v1169, %v1322
        %v1327 = vadd.f32 %v1174, %v1322
        %v1328 = vadd.f32 %v1179, %v1322
        %v1329 = vadd.f32 %v1184, %v1322
        %v1330 = vadd.f32 %v1189, %v1322
        %v1331 = vadd.f32 %v1194, %v1322
        %v1332 = vadd.f32 %v1199, %v1322
        %v1333 = vadd.f32 %v1204, %v1322
        %v1334 = vadd.f32 %v1209, %v1322
        %v1335 = vadd.f32 %v1214, %v1322
        %v1336 = vadd.f32 %v1219, %v1322
        %v1337 = vadd.f32 %v1224, %v1322
        %v1338 = vadd.f32 %v1229, %v1322
        %v1339 = vadd.f32 %v1234, %v1322
        %v1340 = vadd.f32 %v1239, %v1322
        %v1341 = vadd.f32 %v1244, %v1322
        %v1342 = vadd.f32 %v1249, %v1322
        %v1343 = vadd.f32 %v1254, %v1322
        %v1344 = vadd.f32 %v1259, %v1322
        %v1345 = vadd.f32 %v1264, %v1322
        %v1346 = vadd.f32 %v1269, %v1322
        %v1347 = vadd.f32 %v1274, %v1322
        %v1348 = vadd.f32 %v1279, %v1322
        %v1349 = vadd.f32 %v1284, %v1322
        %v1350 = vadd.f32 %v1289, %v1322
        %v1351 = vadd.f32 %v1294, %v1322
        %v1352 = vadd.f32 %v1299, %v1322
        %v1353 = vadd.f32 %v1304, %v1322
        %v1354 = vadd.f32 %v1309, %v1322
        %v1355 = vadd.f32 %v1314, %v1322
        %1356 = vst [vmem:[%s320] sm:$0xff] %v1324
        %1357 = vst [vmem:[%s320 + $0x8] sm:$0xff] %v1325
        %1358 = vst [vmem:[%s320 + $0x10] sm:$0xff] %v1326
        %1359 = vst [vmem:[%s320 + $0x18] sm:$0xff] %v1327
        %1360 = vst [vmem:[%s320 + $0x20] sm:$0xff] %v1328
        %1361 = vst [vmem:[%s320 + $0x28] sm:$0xff] %v1329
        %1362 = vst [vmem:[%s320 + $0x30] sm:$0xff] %v1330
        %1363 = vst [vmem:[%s320 + $0x38] sm:$0xff] %v1331
        %1364 = vst [vmem:[%s320 + $0x40] sm:$0xff] %v1332
        %1365 = vst [vmem:[%s320 + $0x48] sm:$0xff] %v1333
        %1366 = vst [vmem:[%s320 + $0x50] sm:$0xff] %v1334
        %1367 = vst [vmem:[%s320 + $0x58] sm:$0xff] %v1335
        %1368 = vst [vmem:[%s320 + $0x60] sm:$0xff] %v1336
        %1369 = vst [vmem:[%s320 + $0x68] sm:$0xff] %v1337
        %1370 = vst [vmem:[%s320 + $0x70] sm:$0xff] %v1338
        %1371 = vst [vmem:[%s320 + $0x78] sm:$0xff] %v1339
        %1372 = vst [vmem:[%s320 + $0x80] sm:$0xff] %v1340
        %1373 = vst [vmem:[%s320 + $0x88] sm:$0xff] %v1341
        %1374 = vst [vmem:[%s320 + $0x90] sm:$0xff] %v1342
        %1375 = vst [vmem:[%s320 + $0x98] sm:$0xff] %v1343
        %1376 = vst [vmem:[%s320 + $0xa0] sm:$0xff] %v1344
        %1377 = vst [vmem:[%s320 + $0xa8] sm:$0xff] %v1345
        %1378 = vst [vmem:[%s320 + $0xb0] sm:$0xff] %v1346
        %1379 = vst [vmem:[%s320 + $0xb8] sm:$0xff] %v1347
        %1380 = vst [vmem:[%s320 + $0xc0] sm:$0xff] %v1348
        %1381 = vst [vmem:[%s320 + $0xc8] sm:$0xff] %v1349
        %1382 = vst [vmem:[%s320 + $0xd0] sm:$0xff] %v1350
        %1383 = vst [vmem:[%s320 + $0xd8] sm:$0xff] %v1351
        %1384 = vst [vmem:[%s320 + $0xe0] sm:$0xff] %v1352
        %1385 = vst [vmem:[%s320 + $0xe8] sm:$0xff] %v1353
        %1386 = vst [vmem:[%s320 + $0xf0] sm:$0xff] %v1354
        %1387 = vst [vmem:[%s320 + $0xf8] sm:$0xff] %v1355
        %s1388 = sand.u32 %s196, 1
        %s1389 = scalar_lea.sflag [#allocation3], %s1388
        %s1390 = sand.u32 %s196, 1
        %s1391 = smul.addr %s1390, 256
        %s1392 = scalar_lea.vmem [#allocation2], %s1391
        // Predicated region
        $region49: #{tpu_custom_call.1} parent=47 // pred_check
          %p1393 = pneg %p206
        $region50: #{tpu_custom_call.1} parent=47 // pred_check_branch
          %1395 = sbr.rel (%p1393) target = $region52
        $region51: #{tpu_custom_call.1} parent=47 // pred_region
          %s1396 = smul.u32 32, %s21
          %s1398 = ssub.s32 4096, 4096
          %1399 = vsyncadd %s1389, %s1398
          %s1400 = smul.addr %s1396, 128
          %s1401 = scalar_lea.hbm %s7, %s1400
          %s1402 = sshll.u32 %s1392, 4
          %s1403 = int_to_ptr.vmem [resolvable:$true] %s1402
          %1408 = dma.vmem_to_hbm [thread:$0]  %s1403, 4096, %s1401, %s1389, 128, 128, 8
        $region52: #{tpu_custom_call.1} parent=47 // pred_fallthru
          _
      $region48: #{tpu_custom_call.1} parent=5 // pred_fallthru
        _
      %p1409 = scmp.le.s32.totalorder 2, %s16
      // Predicated region
      $region53: #{tpu_custom_call.1} parent=5 // pred_check
        %p1410 = pneg %p1409
      $region54: #{tpu_custom_call.1} parent=5 // pred_check_branch
        %1412 = sbr.rel (%p1410) target = $region56
      $region55: #{tpu_custom_call.1} parent=5 // pred_region
        %s1413 = ssub.s32 %s16, 2
        // Predicated region
        $region57: #{tpu_custom_call.1} parent=55 // pred_check
          %p1414 = pneg %p212
        $region58: #{tpu_custom_call.1} parent=55 // pred_check_branch
          %1416 = sbr.rel (%p1414) target = $region60
        $region59: #{tpu_custom_call.1} parent=55 // pred_region
          %s1417 = sand.u32 %s197, 1
          %s1418 = scalar_lea.sflag [#allocation3], %s1417
          %s1419 = sand.u32 %s197, 1
          %s1420 = smul.addr %s1419, 256
          %s1421 = scalar_lea.vmem [#allocation2], %s1420
          %1422 = dma.done %s1418, 4096
        $region60: #{tpu_custom_call.1} parent=55 // pred_fallthru
          _
      $region56: #{tpu_custom_call.1} parent=5 // pred_fallthru
        _
    $region6: #{tpu_custom_call.1} parent=1 // loop_footer
      %s20 = sadd.s32 1, %s16
    $region7: #{tpu_custom_call.1} parent=1 // loop_footer_branch
      %15 = sbr.rel target = $region3
    $region8: #{tpu_custom_call.1} parent=1 // loop_exit
      _
    %1423 = vsyncpa [#allocation3], 1
    %s1424 = scalar_lea.sflag [#allocation3], 1
    %1425 = vsyncpa %s1424, 1

</llo_original>
